<compile_context>
chip_gen: v5e
topology: v5e:2x2
jax: 0.10.0
libtpu: 0.0.40
codegen_flags: <defaults>
</compile_context>

<pallas_src>
import jax
import jax.numpy as jnp
from jax.experimental import pallas as pl
from jax.experimental.pallas import tpu as pltpu


def _round_up(x, m):
    return (x + m - 1) // m * m


def _fcn_kernel(x_ref, w_ref, b_ref, y_ref):
    # x: (TM, D)  w: (D, C_pad)  b: (1, C_pad)  y: (TM, C_pad)
    acc = jnp.dot(x_ref[...], w_ref[...], preferred_element_type=jnp.float32)
    y_ref[...] = (acc + b_ref[...].astype(jnp.float32)).astype(y_ref.dtype)


def fcn_forward(out, w_cmd, b_cmd, w_args, b_args, n_args, args_dim, *,
                block_m=512):
    """out: (S, N, d_model); weights stored as (d_model, out_features)
    (transposed w.r.t. PyTorch's nn.Linear weight layout)."""
    S, N, d_model = out.shape
    n_commands = w_cmd.shape[1]
    n_args_total = w_args.shape[1]
    M = S * N
    C = n_commands + n_args_total

    # ---- Fuse the two heads into one lane-dense output slab (cols % 128 == 0).
    C_pad = _round_up(C, 128)
    w = jnp.concatenate([w_cmd, w_args], axis=1)
    b = jnp.concatenate([b_cmd, b_args], axis=0)
    if C_pad != C:
        w = jnp.pad(w, ((0, 0), (0, C_pad - C)))
        b = jnp.pad(b, ((0, C_pad - C),))
    b2 = b.reshape(1, C_pad)

    # ---- Tile over rows (M = S*N).  TM is a multiple of 8; weights stay resident.
    tm = min(block_m, _round_up(M, 8))
    M_pad = _round_up(M, tm)
    x = out.reshape(M, d_model)
    if M_pad != M:
        x = jnp.pad(x, ((0, M_pad - M), (0, 0)))

    grid = (M_pad // tm,)

    itemsize = jnp.dtype(out.dtype).itemsize
    # Advisory cost estimate for XLA's scheduler (bandwidth-bound custom call).
    bytes_accessed = (x.size * x.dtype.itemsize
                      + w.size * w.dtype.itemsize
                      + b2.size * b2.dtype.itemsize
                      + M_pad * C_pad * itemsize)
    cost = pl.CostEstimate(flops=2 * M_pad * d_model * C_pad,
                           transcendentals=0,
                           bytes_accessed=bytes_accessed)

    # Explicit VMEM budget: double-buffered x/out tiles + resident weights/bias
    # (+ headroom), capped below v7x's 64 MiB physical VMEM.
    tile_bytes = tm * d_model * itemsize + tm * C_pad * itemsize
    const_bytes = d_model * C_pad * itemsize + C_pad * itemsize
    vmem_limit = int(min(2 * (tile_bytes + const_bytes) + (4 << 20), 60 << 20))

    y = pl.pallas_call(
        _fcn_kernel,
        out_shape=jax.ShapeDtypeStruct((M_pad, C_pad), out.dtype),
        grid_spec=pltpu.PrefetchScalarGridSpec(
            num_scalar_prefetch=0,
            grid=grid,
            in_specs=[
                pl.BlockSpec((tm, d_model), lambda i: (i, 0)),      # x row tile
                pl.BlockSpec((d_model, C_pad), lambda i: (0, 0)),   # fused W (resident)
                pl.BlockSpec((1, C_pad), lambda i: (0, 0)),         # fused bias (resident)
            ],
            out_specs=pl.BlockSpec((tm, C_pad), lambda i: (i, 0)),
        ),
        compiler_params=pltpu.CompilerParams(
            dimension_semantics=("parallel",),
            vmem_limit_bytes=vmem_limit,
        ),
        cost_estimate=cost,
    )(x, w, b2)

    # Strip row/column padding and split the fused slab back into the two heads.
    y = y[:M]
    command_logits = y[:, :n_commands].reshape(S, N, n_commands)
    args_logits = y[:, n_commands:C].reshape(S, N, n_args, args_dim)
    return command_logits, args_logits


if __name__ == "__main__":
    # Small, module-consistent shapes.
    S, N = 8, 2
    d_model = 32
    n_commands = 6
    n_args = 4
    args_dim = 256

    key = jax.random.PRNGKey(0)
    k_x, k_wc, k_bc, k_wa, k_ba = jax.random.split(key, 5)

    out = jax.random.normal(k_x, (S, N, d_model), dtype=jnp.float32)
    # Deterministic parameter init (stored as (in, out) for the kernel).
    w_cmd = jax.random.normal(k_wc, (d_model, n_commands), dtype=jnp.float32) * 0.02
    b_cmd = jax.random.normal(k_bc, (n_commands,), dtype=jnp.float32) * 0.02
    w_args = jax.random.normal(k_wa, (d_model, n_args * args_dim), dtype=jnp.float32) * 0.02
    b_args = jax.random.normal(k_ba, (n_args * args_dim,), dtype=jnp.float32) * 0.02

    cmd_logits, args_logits = fcn_forward(out, w_cmd, b_cmd, w_args, b_args,
                                          n_args, args_dim)
    jax.block_until_ready((cmd_logits, args_logits))

    # Reference check against plain JAX.
    ref_cmd = out @ w_cmd + b_cmd
    ref_args = (out @ w_args + b_args).reshape(S, N, n_args, args_dim)
    assert cmd_logits.shape == (S, N, n_commands)
    assert args_logits.shape == (S, N, n_args, args_dim)
    assert jnp.allclose(cmd_logits, ref_cmd, atol=1e-5)
    assert jnp.allclose(args_logits, ref_args, atol=1e-5)

    print("KERNEL_OK")
</pallas_src>

<mosaic_0001>
module attributes {stable_mosaic.version = 11 : i64} {
  func.func @_fcn_kernel(%arg0: i32, %arg1: memref<16x32xf32, #tpu.memory_space<vmem>>, %arg2: memref<32x1152xf32, #tpu.memory_space<vmem>>, %arg3: memref<1x1152xf32, #tpu.memory_space<vmem>>, %arg4: memref<16x1152xf32, #tpu.memory_space<vmem>>) attributes {dimension_semantics = [#tpu.dimension_semantics<parallel>], iteration_bounds = array<i64: 1>, scalar_prefetch = 0 : i64, scratch_operands = 0 : i64, tpu.core_type = #tpu.core_type<tc>, window_params = [{transform_indices = @transform_0, window_bounds = array<i64: 16, 32>}, {pipeline_mode = #tpu.pipeline_mode<synchronous>, transform_indices = @transform_1, window_bounds = array<i64: 32, 1152>}, {pipeline_mode = #tpu.pipeline_mode<synchronous>, transform_indices = @transform_2, window_bounds = array<i64: 1, 1152>}, {transform_indices = @transform_3, window_bounds = array<i64: 16, 1152>}]} {
    %c0 = arith.constant 0 : index
    %c0_0 = arith.constant 0 : index
    %0 = vector.load %arg1[%c0, %c0_0] : memref<16x32xf32, #tpu.memory_space<vmem>>, vector<16x32xf32>
    %c0_1 = arith.constant 0 : index
    %c0_2 = arith.constant 0 : index
    %1 = vector.load %arg2[%c0_1, %c0_2] : memref<32x1152xf32, #tpu.memory_space<vmem>>, vector<32x1152xf32>
    %cst = arith.constant dense<0.000000e+00> : vector<16x1152xf32>
    %2 = tpu.matmul %0, %1, %cst {dimension_numbers = #tpu.dot_dimension_numbers<[1], [0], [0], [1], [0, 0, 1, 1], [], []>} : vector<16x32xf32>, vector<32x1152xf32>, vector<16x1152xf32> -> vector<16x1152xf32>
    %c0_3 = arith.constant 0 : index
    %c0_4 = arith.constant 0 : index
    %3 = vector.load %arg3[%c0_3, %c0_4] : memref<1x1152xf32, #tpu.memory_space<vmem>>, vector<1x1152xf32>
    %4 = vector.broadcast %3 : vector<1x1152xf32> to vector<16x1152xf32>
    %5 = arith.addf %2, %4 : vector<16x1152xf32>
    %c0_5 = arith.constant 0 : index
    %c0_6 = arith.constant 0 : index
    %6 = vector.load %arg4[%c0_5, %c0_6] : memref<16x1152xf32, #tpu.memory_space<vmem>>, vector<16x1152xf32>
    tpu.vector_store %arg4[%c0_5, %c0_6], %5 {strides = array<i32>} : memref<16x1152xf32, #tpu.memory_space<vmem>>, vector<16x1152xf32>,
    return
  }
  func.func @transform_0(%arg0: i32) -> (i32, i32) {
    %c0_i32 = arith.constant 0 : i32
    %c0_i32_0 = arith.constant 0 : i32
    return %arg0, %c0_i32 : i32, i32
  }
  func.func @transform_1(%arg0: i32) -> (i32, i32) {
    %c0_i32 = arith.constant 0 : i32
    %c0_i32_0 = arith.constant 0 : i32
    %c0_i32_1 = arith.constant 0 : i32
    return %c0_i32, %c0_i32_0 : i32, i32
  }
  func.func @transform_2(%arg0: i32) -> (i32, i32) {
    %c0_i32 = arith.constant 0 : i32
    %c0_i32_0 = arith.constant 0 : i32
    %c0_i32_1 = arith.constant 0 : i32
    return %c0_i32, %c0_i32_0 : i32, i32
  }
  func.func @transform_3(%arg0: i32) -> (i32, i32) {
    %c0_i32 = arith.constant 0 : i32
    %c0_i32_0 = arith.constant 0 : i32
    return %arg0, %c0_i32 : i32, i32
  }
}

</mosaic_0001>

<llo_original>
// kernel: tpu_custom_call.1
$region0: #{tpu_custom_call.1}
  #allocation0 [shape = 'u32[]', space=smem, size = 0x4, offset = 0x4, fixed_abs, tag = 'smem constant byte address 0x4 - core index']
  #allocation1 [shape = 'u32[72,128]{1,0:T(1,128)}', space=vmem, size = 0x9000, scoped, tag = 'internal scratch']
  %s0 = inlined_call_operand.hbm [shape: f32[16,32], index: 0, kind: input, shape index: {}]
  %s1 = inlined_call_operand.hbm [shape: f32[32,1152], index: 1, kind: input, shape index: {}]
  %s2 = inlined_call_operand.hbm [shape: f32[1,1152], index: 2, kind: input, shape index: {}]
  %s3 = inlined_call_operand.hbm [shape: f32[16,1152], index: 3, kind: output, shape index: {}]
  %s4 = sld [smem:[#allocation0]]
  $region34: #{tpu_custom_call.1} parent=0
    _
  %s6 = ssub.s32 1, %s4
  %s7 = scalar_select 0, %s6, %s4
  $region1: #{tpu_custom_call.1} parent=0
    #allocation2 [shape = 'u8[8192]{0}', space=vmem, size = 0x2000, scoped, tag = 'input window, operand 0, single buffered']
    #allocation3 [shape = 's32[1]{0}', space=sflag, size = 0x4, scoped, tag = 'scoped memory for tpu_custom_call.1']
    #allocation4 [shape = 's32[1]{0}', space=sflag, size = 0x4, scoped, tag = 'scoped memory for tpu_custom_call.1']
    #allocation5 [shape = 'u8[147456]{0}', space=vmem, size = 0x24000, scoped, tag = 'input window, operand 1, single buffered']
    #allocation6 [shape = 's32[1]{0}', space=sflag, size = 0x4, scoped, tag = 'scoped memory for tpu_custom_call.1']
    #allocation7 [shape = 'u8[4608]{0}', space=vmem, size = 0x1400, scoped, tag = 'input window, operand 2, single buffered']
    #allocation8 [shape = 'u8[73728]{0}', space=vmem, size = 0x12000, scoped, tag = 'output window, operand 0, single buffered']
    %8 = vsyncpa [#allocation3], 0
    %9 = vsyncpa [#allocation6], 0
    %10 = vsyncpa [#allocation4], 0
    // Predicated region
    $region2: #{tpu_custom_call.1} parent=1 // pred_check
      _
    $region3: #{tpu_custom_call.1} parent=1 // pred_check_branch
      %12 = sbr.rel (0) target = $region5
    $region4: #{tpu_custom_call.1} parent=1 // pred_region
      %14 = vsyncadd [#allocation3], 0
      %s15 = sshll.u32 %s0, 4
      %s16 = int_to_ptr.hbm [resolvable:$true] %s15
      %s17 = sshll.u32 [#allocation2], 4
      %s18 = int_to_ptr.vmem [resolvable:$true] %s17
      %23 = dma.hbm_to_vmem [thread:$0]  %s16, 256, %s18, [#allocation3], 128, 128, 8
    $region5: #{tpu_custom_call.1} parent=1 // pred_fallthru
      _
    // Predicated region
    $region6: #{tpu_custom_call.1} parent=1 // pred_check
      _
    $region7: #{tpu_custom_call.1} parent=1 // pred_check_branch
      %25 = sbr.rel (0) target = $region9
    $region8: #{tpu_custom_call.1} parent=1 // pred_region
      %27 = vsyncadd [#allocation6], 0
      %s28 = sshll.u32 %s1, 4
      %s29 = int_to_ptr.hbm [resolvable:$true] %s28
      %s30 = sshll.u32 [#allocation5], 4
      %s31 = int_to_ptr.vmem [resolvable:$true] %s30
      %36 = dma.hbm_to_vmem [thread:$0]  %s29, 4608, %s31, [#allocation6], 1152, 1152, 72
    $region9: #{tpu_custom_call.1} parent=1 // pred_fallthru
      _
    // Predicated region
    $region10: #{tpu_custom_call.1} parent=1 // pred_check
      _
    $region11: #{tpu_custom_call.1} parent=1 // pred_check_branch
      %38 = sbr.rel (0) target = $region13
    $region12: #{tpu_custom_call.1} parent=1 // pred_region
      %40 = vsyncadd [#allocation6], 0
      %s42 = sshll.u32 %s2, 4
      %s43 = int_to_ptr.hbm [resolvable:$true] %s42
      %s44 = sshll.u32 [#allocation7], 4
      %s45 = int_to_ptr.vmem [resolvable:$true] %s44
      %47 = dma.hbm_to_vmem [thread:$0]  %s43, 144, %s45, [#allocation6]
    $region13: #{tpu_custom_call.1} parent=1 // pred_fallthru
      _
    // Predicated region
    $region14: #{tpu_custom_call.1} parent=1 // pred_check
      _
    $region15: #{tpu_custom_call.1} parent=1 // pred_check_branch
      %49 = sbr.rel (0) target = $region17
    $region16: #{tpu_custom_call.1} parent=1 // pred_region
      %51 = dma.done [#allocation3], 256
    $region17: #{tpu_custom_call.1} parent=1 // pred_fallthru
      _
    // Predicated region
    $region18: #{tpu_custom_call.1} parent=1 // pred_check
      _
    $region19: #{tpu_custom_call.1} parent=1 // pred_check_branch
      %53 = sbr.rel (0) target = $region21
    $region20: #{tpu_custom_call.1} parent=1 // pred_region
      %55 = dma.done [#allocation6], 4608
    $region21: #{tpu_custom_call.1} parent=1 // pred_fallthru
      _
    // Predicated region
    $region22: #{tpu_custom_call.1} parent=1 // pred_check
      _
    $region23: #{tpu_custom_call.1} parent=1 // pred_check_branch
      %57 = sbr.rel (0) target = $region25
    $region24: #{tpu_custom_call.1} parent=1 // pred_region
      %59 = dma.done [#allocation6], 144
    $region25: #{tpu_custom_call.1} parent=1 // pred_fallthru
      _
    %v60 = vld [vmem:[#allocation2] sm:$0xff]
    %v61 = vld [vmem:[#allocation2 + $0x8] sm:$0xff]
    %v62 = vld [vmem:[#allocation5] sm:$0xff]
    %v63 = vld [vmem:[#allocation5 + $0x8] sm:$0xff]
    %v64 = vld [vmem:[#allocation5 + $0x10] sm:$0xff]
    %v65 = vld [vmem:[#allocation5 + $0x18] sm:$0xff]
    %v66 = vld [vmem:[#allocation5 + $0x20] sm:$0xff]
    %v67 = vld [vmem:[#allocation5 + $0x28] sm:$0xff]
    %v68 = vld [vmem:[#allocation5 + $0x30] sm:$0xff]
    %v69 = vld [vmem:[#allocation5 + $0x38] sm:$0xff]
    %v70 = vld [vmem:[#allocation5 + $0x40] sm:$0xff]
    %v71 = vld [vmem:[#allocation5 + $0x48] sm:$0xff]
    %v72 = vld [vmem:[#allocation5 + $0x50] sm:$0xff]
    %v73 = vld [vmem:[#allocation5 + $0x58] sm:$0xff]
    %v74 = vld [vmem:[#allocation5 + $0x60] sm:$0xff]
    %v75 = vld [vmem:[#allocation5 + $0x68] sm:$0xff]
    %v76 = vld [vmem:[#allocation5 + $0x70] sm:$0xff]
    %v77 = vld [vmem:[#allocation5 + $0x78] sm:$0xff]
    %v78 = vld [vmem:[#allocation5 + $0x80] sm:$0xff]
    %v79 = vld [vmem:[#allocation5 + $0x88] sm:$0xff]
    %v80 = vld [vmem:[#allocation5 + $0x90] sm:$0xff]
    %v81 = vld [vmem:[#allocation5 + $0x98] sm:$0xff]
    %v82 = vld [vmem:[#allocation5 + $0xa0] sm:$0xff]
    %v83 = vld [vmem:[#allocation5 + $0xa8] sm:$0xff]
    %v84 = vld [vmem:[#allocation5 + $0xb0] sm:$0xff]
    %v85 = vld [vmem:[#allocation5 + $0xb8] sm:$0xff]
    %v86 = vld [vmem:[#allocation5 + $0xc0] sm:$0xff]
    %v87 = vld [vmem:[#allocation5 + $0xc8] sm:$0xff]
    %v88 = vld [vmem:[#allocation5 + $0xd0] sm:$0xff]
    %v89 = vld [vmem:[#allocation5 + $0xd8] sm:$0xff]
    %v90 = vld [vmem:[#allocation5 + $0xe0] sm:$0xff]
    %v91 = vld [vmem:[#allocation5 + $0xe8] sm:$0xff]
    %v92 = vld [vmem:[#allocation5 + $0xf0] sm:$0xff]
    %v93 = vld [vmem:[#allocation5 + $0xf8] sm:$0xff]
    %v94 = vld [vmem:[#allocation5 + $0x100] sm:$0xff]
    %v95 = vld [vmem:[#allocation5 + $0x108] sm:$0xff]
    %v96 = vld [vmem:[#allocation5 + $0x110] sm:$0xff]
    %v97 = vld [vmem:[#allocation5 + $0x118] sm:$0xff]
    %v98 = vld [vmem:[#allocation7] sm:$0xff]
    %v99 = vld [vmem:[#allocation7 + $0x8] sm:$0x1]
    %v102 = vperm.slane %v98, 0
    %v103 = vperm.slane %v98, 1
    %v104 = vperm.slane %v98, 2
    %v105 = vperm.slane %v98, 3
    %v106 = vperm.slane %v98, 4
    %v107 = vperm.slane %v98, 5
    %v108 = vperm.slane %v98, 6
    %v109 = vperm.slane %v98, 7
    %v110 = vperm.slane %v99, 0
    %vm120 = vcmask 261120
    %v122 = vsel %vm120, %v60, 0
    %v125 = vsel %vm120, %v61, 0
    %127 = vmatpush.msra.mxu0 0.0
    %128 = vmatpush.msra.mxu0 0.0
    %129 = vmatpush.msra.mxu0 0.0
    %130 = vmatpush.msra.mxu0 0.0
    %131 = vmatpush.msra.mxu0 0.0
    %132 = vmatpush.msra.mxu0 0.0
    %133 = vmatpush.msra.mxu0 0.0
    %134 = vmatpush.msra.mxu0 0.0
    %135 = vmatpush.msra.mxu0 0.0
    %136 = vmatpush.msra.mxu0 0.0
    %137 = vmatpush.msra.mxu0 0.0
    %138 = vmatpush.msra.mxu0 0.0
    %139 = vmatpush.msra.mxu0 %v89
    %140 = vmatpush.msra.mxu0 %v80
    %141 = vmatpush.msra.mxu0 %v71
    %142 = vmatpush.msra.mxu0 %v62
    %143 = vmatmul.f32.gmra.mxu0 %v122
    %v144 = vpop.f32.mrf.mxu0
    %v145 = vadd.f32 %v102, %v144
    %146 = vmatmul.f32.gmra.mxu0 %v125
    %v147 = vpop.f32.mrf.mxu0
    %v148 = vadd.f32 %v102, %v147
    %149 = vdwg.mxu0
    %150 = vmatpush.msra.mxu0 0.0
    %151 = vmatpush.msra.mxu0 0.0
    %152 = vmatpush.msra.mxu0 0.0
    %153 = vmatpush.msra.mxu0 0.0
    %154 = vmatpush.msra.mxu0 0.0
    %155 = vmatpush.msra.mxu0 0.0
    %156 = vmatpush.msra.mxu0 0.0
    %157 = vmatpush.msra.mxu0 0.0
    %158 = vmatpush.msra.mxu0 0.0
    %159 = vmatpush.msra.mxu0 0.0
    %160 = vmatpush.msra.mxu0 0.0
    %161 = vmatpush.msra.mxu0 0.0
    %162 = vmatpush.msra.mxu0 %v90
    %163 = vmatpush.msra.mxu0 %v81
    %164 = vmatpush.msra.mxu0 %v72
    %165 = vmatpush.msra.mxu0 %v63
    %166 = vmatmul.f32.gmra.mxu0 %v122
    %v167 = vpop.f32.mrf.mxu0
    %v168 = vadd.f32 %v103, %v167
    %169 = vmatmul.f32.gmra.mxu0 %v125
    %v170 = vpop.f32.mrf.mxu0
    %v171 = vadd.f32 %v103, %v170
    %172 = vdwg.mxu0
    %173 = vmatpush.msra.mxu0 0.0
    %174 = vmatpush.msra.mxu0 0.0
    %175 = vmatpush.msra.mxu0 0.0
    %176 = vmatpush.msra.mxu0 0.0
    %177 = vmatpush.msra.mxu0 0.0
    %178 = vmatpush.msra.mxu0 0.0
    %179 = vmatpush.msra.mxu0 0.0
    %180 = vmatpush.msra.mxu0 0.0
    %181 = vmatpush.msra.mxu0 0.0
    %182 = vmatpush.msra.mxu0 0.0
    %183 = vmatpush.msra.mxu0 0.0
    %184 = vmatpush.msra.mxu0 0.0
    %185 = vmatpush.msra.mxu0 %v91
    %186 = vmatpush.msra.mxu0 %v82
    %187 = vmatpush.msra.mxu0 %v73
    %188 = vmatpush.msra.mxu0 %v64
    %189 = vmatmul.f32.gmra.mxu0 %v122
    %v190 = vpop.f32.mrf.mxu0
    %v191 = vadd.f32 %v104, %v190
    %192 = vmatmul.f32.gmra.mxu0 %v125
    %v193 = vpop.f32.mrf.mxu0
    %v194 = vadd.f32 %v104, %v193
    %195 = vdwg.mxu0
    %196 = vmatpush.msra.mxu0 0.0
    %197 = vmatpush.msra.mxu0 0.0
    %198 = vmatpush.msra.mxu0 0.0
    %199 = vmatpush.msra.mxu0 0.0
    %200 = vmatpush.msra.mxu0 0.0
    %201 = vmatpush.msra.mxu0 0.0
    %202 = vmatpush.msra.mxu0 0.0
    %203 = vmatpush.msra.mxu0 0.0
    %204 = vmatpush.msra.mxu0 0.0
    %205 = vmatpush.msra.mxu0 0.0
    %206 = vmatpush.msra.mxu0 0.0
    %207 = vmatpush.msra.mxu0 0.0
    %208 = vmatpush.msra.mxu0 %v92
    %209 = vmatpush.msra.mxu0 %v83
    %210 = vmatpush.msra.mxu0 %v74
    %211 = vmatpush.msra.mxu0 %v65
    %212 = vmatmul.f32.gmra.mxu0 %v122
    %v213 = vpop.f32.mrf.mxu0
    %v214 = vadd.f32 %v105, %v213
    %215 = vmatmul.f32.gmra.mxu0 %v125
    %v216 = vpop.f32.mrf.mxu0
    %v217 = vadd.f32 %v105, %v216
    %218 = vdwg.mxu0
    %219 = vmatpush.msra.mxu0 0.0
    %220 = vmatpush.msra.mxu0 0.0
    %221 = vmatpush.msra.mxu0 0.0
    %222 = vmatpush.msra.mxu0 0.0
    %223 = vmatpush.msra.mxu0 0.0
    %224 = vmatpush.msra.mxu0 0.0
    %225 = vmatpush.msra.mxu0 0.0
    %226 = vmatpush.msra.mxu0 0.0
    %227 = vmatpush.msra.mxu0 0.0
    %228 = vmatpush.msra.mxu0 0.0
    %229 = vmatpush.msra.mxu0 0.0
    %230 = vmatpush.msra.mxu0 0.0
    %231 = vmatpush.msra.mxu0 %v93
    %232 = vmatpush.msra.mxu0 %v84
    %233 = vmatpush.msra.mxu0 %v75
    %234 = vmatpush.msra.mxu0 %v66
    %235 = vmatmul.f32.gmra.mxu0 %v122
    %v236 = vpop.f32.mrf.mxu0
    %v237 = vadd.f32 %v106, %v236
    %238 = vmatmul.f32.gmra.mxu0 %v125
    %v239 = vpop.f32.mrf.mxu0
    %v240 = vadd.f32 %v106, %v239
    %241 = vdwg.mxu0
    %242 = vmatpush.msra.mxu0 0.0
    %243 = vmatpush.msra.mxu0 0.0
    %244 = vmatpush.msra.mxu0 0.0
    %245 = vmatpush.msra.mxu0 0.0
    %246 = vmatpush.msra.mxu0 0.0
    %247 = vmatpush.msra.mxu0 0.0
    %248 = vmatpush.msra.mxu0 0.0
    %249 = vmatpush.msra.mxu0 0.0
    %250 = vmatpush.msra.mxu0 0.0
    %251 = vmatpush.msra.mxu0 0.0
    %252 = vmatpush.msra.mxu0 0.0
    %253 = vmatpush.msra.mxu0 0.0
    %254 = vmatpush.msra.mxu0 %v94
    %255 = vmatpush.msra.mxu0 %v85
    %256 = vmatpush.msra.mxu0 %v76
    %257 = vmatpush.msra.mxu0 %v67
    %258 = vmatmul.f32.gmra.mxu0 %v122
    %v259 = vpop.f32.mrf.mxu0
    %v260 = vadd.f32 %v107, %v259
    %261 = vmatmul.f32.gmra.mxu0 %v125
    %v262 = vpop.f32.mrf.mxu0
    %v263 = vadd.f32 %v107, %v262
    %264 = vdwg.mxu0
    %265 = vmatpush.msra.mxu0 0.0
    %266 = vmatpush.msra.mxu0 0.0
    %267 = vmatpush.msra.mxu0 0.0
    %268 = vmatpush.msra.mxu0 0.0
    %269 = vmatpush.msra.mxu0 0.0
    %270 = vmatpush.msra.mxu0 0.0
    %271 = vmatpush.msra.mxu0 0.0
    %272 = vmatpush.msra.mxu0 0.0
    %273 = vmatpush.msra.mxu0 0.0
    %274 = vmatpush.msra.mxu0 0.0
    %275 = vmatpush.msra.mxu0 0.0
    %276 = vmatpush.msra.mxu0 0.0
    %277 = vmatpush.msra.mxu0 %v95
    %278 = vmatpush.msra.mxu0 %v86
    %279 = vmatpush.msra.mxu0 %v77
    %280 = vmatpush.msra.mxu0 %v68
    %281 = vmatmul.f32.gmra.mxu0 %v122
    %v282 = vpop.f32.mrf.mxu0
    %v283 = vadd.f32 %v108, %v282
    %284 = vmatmul.f32.gmra.mxu0 %v125
    %v285 = vpop.f32.mrf.mxu0
    %v286 = vadd.f32 %v108, %v285
    %287 = vdwg.mxu0
    %288 = vmatpush.msra.mxu0 0.0
    %289 = vmatpush.msra.mxu0 0.0
    %290 = vmatpush.msra.mxu0 0.0
    %291 = vmatpush.msra.mxu0 0.0
    %292 = vmatpush.msra.mxu0 0.0
    %293 = vmatpush.msra.mxu0 0.0
    %294 = vmatpush.msra.mxu0 0.0
    %295 = vmatpush.msra.mxu0 0.0
    %296 = vmatpush.msra.mxu0 0.0
    %297 = vmatpush.msra.mxu0 0.0
    %298 = vmatpush.msra.mxu0 0.0
    %299 = vmatpush.msra.mxu0 0.0
    %300 = vmatpush.msra.mxu0 %v96
    %301 = vmatpush.msra.mxu0 %v87
    %302 = vmatpush.msra.mxu0 %v78
    %303 = vmatpush.msra.mxu0 %v69
    %304 = vmatmul.f32.gmra.mxu0 %v122
    %v305 = vpop.f32.mrf.mxu0
    %v306 = vadd.f32 %v109, %v305
    %307 = vmatmul.f32.gmra.mxu0 %v125
    %v308 = vpop.f32.mrf.mxu0
    %v309 = vadd.f32 %v109, %v308
    %310 = vdwg.mxu0
    %311 = vmatpush.msra.mxu0 0.0
    %312 = vmatpush.msra.mxu0 0.0
    %313 = vmatpush.msra.mxu0 0.0
    %314 = vmatpush.msra.mxu0 0.0
    %315 = vmatpush.msra.mxu0 0.0
    %316 = vmatpush.msra.mxu0 0.0
    %317 = vmatpush.msra.mxu0 0.0
    %318 = vmatpush.msra.mxu0 0.0
    %319 = vmatpush.msra.mxu0 0.0
    %320 = vmatpush.msra.mxu0 0.0
    %321 = vmatpush.msra.mxu0 0.0
    %322 = vmatpush.msra.mxu0 0.0
    %323 = vmatpush.msra.mxu0 %v97
    %324 = vmatpush.msra.mxu0 %v88
    %325 = vmatpush.msra.mxu0 %v79
    %326 = vmatpush.msra.mxu0 %v70
    %327 = vmatmul.f32.gmra.mxu0 %v122
    %v328 = vpop.f32.mrf.mxu0
    %v329 = vadd.f32 %v110, %v328
    %330 = vmatmul.f32.gmra.mxu0 %v125
    %v331 = vpop.f32.mrf.mxu0
    %v332 = vadd.f32 %v110, %v331
    %333 = vdwg.mxu0
    %334 = vst [vmem:[#allocation8] sm:$0xff] %v145
    %335 = vst [vmem:[#allocation8 + $0x8] sm:$0xff] %v168
    %336 = vst [vmem:[#allocation8 + $0x10] sm:$0xff] %v191
    %337 = vst [vmem:[#allocation8 + $0x18] sm:$0xff] %v214
    %338 = vst [vmem:[#allocation8 + $0x20] sm:$0xff] %v237
    %339 = vst [vmem:[#allocation8 + $0x28] sm:$0xff] %v260
    %340 = vst [vmem:[#allocation8 + $0x30] sm:$0xff] %v283
    %341 = vst [vmem:[#allocation8 + $0x38] sm:$0xff] %v306
    %342 = vst [vmem:[#allocation8 + $0x40] sm:$0xff] %v329
    %343 = vst [vmem:[#allocation8 + $0x48] sm:$0xff] %v148
    %344 = vst [vmem:[#allocation8 + $0x50] sm:$0xff] %v171
    %345 = vst [vmem:[#allocation8 + $0x58] sm:$0xff] %v194
    %346 = vst [vmem:[#allocation8 + $0x60] sm:$0xff] %v217
    %347 = vst [vmem:[#allocation8 + $0x68] sm:$0xff] %v240
    %348 = vst [vmem:[#allocation8 + $0x70] sm:$0xff] %v263
    %349 = vst [vmem:[#allocation8 + $0x78] sm:$0xff] %v286
    %350 = vst [vmem:[#allocation8 + $0x80] sm:$0xff] %v309
    %351 = vst [vmem:[#allocation8 + $0x88] sm:$0xff] %v332
    // Predicated region
    $region26: #{tpu_custom_call.1} parent=1 // pred_check
      _
    $region27: #{tpu_custom_call.1} parent=1 // pred_check_branch
      %353 = sbr.rel (0) target = $region29
    $region28: #{tpu_custom_call.1} parent=1 // pred_region
      %355 = vsyncadd [#allocation4], 0
      %s356 = sshll.u32 [#allocation8], 4
      %s357 = int_to_ptr.vmem [resolvable:$true] %s356
      %s358 = sshll.u32 %s3, 4
      %s359 = int_to_ptr.hbm [resolvable:$true] %s358
      %364 = dma.vmem_to_hbm [thread:$0]  %s357, 2304, %s359, [#allocation4], 1152, 1152, 72
    $region29: #{tpu_custom_call.1} parent=1 // pred_fallthru
      _
    // Predicated region
    $region30: #{tpu_custom_call.1} parent=1 // pred_check
      _
    $region31: #{tpu_custom_call.1} parent=1 // pred_check_branch
      %366 = sbr.rel (0) target = $region33
    $region32: #{tpu_custom_call.1} parent=1 // pred_region
      %368 = dma.done [#allocation4], 2304
    $region33: #{tpu_custom_call.1} parent=1 // pred_fallthru
      _
    %369 = vsyncpa [#allocation3], 1
    %370 = vsyncpa [#allocation6], 1
    %371 = vsyncpa [#allocation4], 1

</llo_original>
